<compile_context>
chip_gen: v6e
topology: v6e:2x2x1
jax: 0.10.0
libtpu: 0.0.40
codegen_flags: <defaults>
</compile_context>

<pallas_src>
import functools

import jax
import jax.numpy as jnp
from jax import lax
from jax.experimental import pallas as pl
from jax.experimental.pallas import tpu as pltpu

_ISSUE_UNROLL = 8  # rows per unrolled group in the DMA-issue loop


def _round_up(x, m):
    return ((x + m - 1) // m) * m


def _sublane_multiple(dtype):
    # Min legal sublane tile: 8 rows for 4-byte, 16 for 2-byte, 32 for 1-byte.
    return max(8, 32 // jnp.dtype(dtype).itemsize)


# --------------------------------------------------------------------------
# Fast path: whole user table resident in VMEM, gather = one-hot MXU matmul.
# --------------------------------------------------------------------------
def _make_lut_kernel(add_inter_emb, out_dtype):
    def kernel(idx_ref, table_ref, *rest):
        if add_inter_emb:
            rel_row_ref, out_ref = rest
        else:
            (out_ref,) = rest
        tb = out_ref.shape[0]
        n_users = table_ref.shape[0]

        ids = idx_ref[...]                                        # (tb, 1) int32
        iota = lax.broadcasted_iota(jnp.int32, (tb, n_users), 1)  # (tb, U)
        onehot = (iota == ids).astype(table_ref.dtype)            # (tb, U)
        rows = jnp.dot(onehot, table_ref[...],
                       preferred_element_type=jnp.float32)        # (tb, D) f32
        if add_inter_emb:
            rows = rows + rel_row_ref[...].astype(jnp.float32)
        out_ref[...] = rows.astype(out_dtype)

    return kernel


# --------------------------------------------------------------------------
# Gather path: table stays in HBM, per-row DMA gather, double-buffered chunks.
# --------------------------------------------------------------------------
def _make_gather_kernel(add_inter_emb):
    def kernel(idx_ref, user_hbm, *rest):
        if add_inter_emb:
            rel_row_ref, out_ref, buf, sem = rest
        else:
            out_ref, buf, sem = rest
            rel_row_ref = None

        tb = out_ref.shape[0]
        i = pl.program_id(0)
        n = pl.num_programs(0)

        def issue(chunk, slot):
            base = chunk * tb

            # Unrolled issue loop: all tb row DMAs go in flight back-to-back.
            @pl.loop(0, tb // _ISSUE_UNROLL)
            def _(g):
                for u in range(_ISSUE_UNROLL):
                    r = g * _ISSUE_UNROLL + u
                    uid = idx_ref[base + r]
                    pltpu.make_async_copy(
                        user_hbm.at[uid], buf.at[slot, r], sem.at[slot]
                    ).start()

        # Prologue: prime slot 0 with chunk 0.
        @pl.when(i == 0)
        def _():
            issue(0, 0)

        # Prefetch the next chunk into the other slot before we block.
        @pl.when(i + 1 < n)
        def _():
            issue(i + 1, (i + 1) % 2)

        slot = i % 2
        # Single aggregate wait: one descriptor sized to the whole (tb, D)
        # slab (total bytes == sum of the tb row copies signaled on this sem).
        pltpu.make_async_copy(buf.at[slot], buf.at[slot], sem.at[slot]).wait()

        rows = buf[slot]
        if add_inter_emb:
            rows = rows + rel_row_ref[...]
        out_ref[...] = rows

    return kernel


# --------------------------------------------------------------------------
# Wrapper
# --------------------------------------------------------------------------
@functools.partial(
    jax.jit, static_argnames=("add_inter_emb", "block_b", "small_table_users")
)
def cfkg_query_encoder(batch_users, user_emb, rel_emb, add_inter_emb=True,
                       block_b=512, small_table_users=1024):
    """Pallas implementation of CFKGQueryEncoder.forward."""
    B = batch_users.shape[0]
    U, D = user_emb.shape
    dtype = user_emb.dtype
    itemsize = jnp.dtype(dtype).itemsize

    sub = _sublane_multiple(dtype)
    tb_cap = max(_round_up(block_b, sub), sub)
    # Aim for >=2 chunks when the batch allows it (keeps both v7x TCs busy on
    # the parallel fast path; gives the gather path a chunk to prefetch).
    tb = max(sub, min(tb_cap, _round_up((B + 1) // 2, sub)))
    b_pad = _round_up(B, tb)
    n_chunks = b_pad // tb

    idx = batch_users.astype(jnp.int32)
    if b_pad != B:
        idx = jnp.pad(idx, (0, b_pad - B))  # pad with row 0 (always valid)

    rel_row = rel_emb[-1:]  # (1, D) "interaction" relation embedding

    if U <= small_table_users:
        # ---- Fast path: VMEM-resident table + one-hot MXU gather -----------
        kernel = _make_lut_kernel(add_inter_emb, dtype)
        in_specs = [
            pl.BlockSpec((tb, 1), lambda i: (i, 0)),   # idx column chunk, VMEM
            pl.BlockSpec((U, D), lambda i: (0, 0)),    # whole user table, VMEM
        ]
        operands = [idx.reshape(b_pad, 1), user_emb]
        if add_inter_emb:
            in_specs.append(pl.BlockSpec((1, D), lambda i: (0, 0)))
            operands.append(rel_row)
        grid_spec = pltpu.PrefetchScalarGridSpec(
            num_scalar_prefetch=0,
            grid=(n_chunks,),
            in_specs=in_specs,
            out_specs=pl.BlockSpec((tb, D), lambda i: (i, 0)),
        )
        semantics = ("parallel",)  # chunks are independent
        flops = 2 * b_pad * U * D + b_pad * D
        bytes_accessed = (b_pad * D + U * D + D) * itemsize + b_pad * 4
    else:
        # ---- Gather path: HBM table, per-row DMA, double-buffered ----------
        kernel = _make_gather_kernel(add_inter_emb)
        in_specs = [pl.BlockSpec(memory_space=pl.ANY)]   # user table in HBM
        operands = [user_emb]
        if add_inter_emb:
            in_specs.append(pl.BlockSpec((1, D), lambda i, idx: (0, 0)))
            operands.append(rel_row)
        grid_spec = pltpu.PrefetchScalarGridSpec(
            num_scalar_prefetch=1,              # batch_users -> SMEM
            grid=(n_chunks,),
            in_specs=in_specs,
            out_specs=pl.BlockSpec((tb, D), lambda i, idx: (i, 0)),
            scratch_shapes=[
                pltpu.VMEM((2, tb, D), dtype),        # double-buffered gather
                pltpu.SemaphoreType.DMA((2,)),        # one DMA sem per slot
            ],
        )
        # Cross-step double buffering carries scratch state between grid
        # steps, so this axis must stay sequential.
        semantics = ("arbitrary",)
        operands = [idx] + operands
        flops = b_pad * D
        bytes_accessed = 2 * b_pad * D * itemsize + b_pad * 4 + D * itemsize

    out = pl.pallas_call(
        kernel,
        out_shape=jax.ShapeDtypeStruct((b_pad, D), dtype),
        grid_spec=grid_spec,
        compiler_params=pltpu.CompilerParams(dimension_semantics=semantics),
        cost_estimate=pl.CostEstimate(
            flops=flops, transcendentals=0, bytes_accessed=bytes_accessed),
    )(*operands)

    return out[:B]


if __name__ == "__main__":
    # Deterministic synthetic parameters (shapes implied by the module __init__).
    num_users = 16       # train_data.num_users
    num_relations = 8    # rel_emb rows (last row = "interaction" relation)
    embed_dim = 128

    key = jax.random.PRNGKey(0)
    k1, k2, k3, k4, k5 = jax.random.split(key, 5)

    user_emb = jax.random.normal(k1, (num_users, embed_dim), dtype=jnp.float32)
    user_emb = user_emb.at[0].set(0.0)  # torch Embedding padding_idx=0 (fwd-equiv)
    rel_emb = jax.random.normal(k2, (num_relations, embed_dim), dtype=jnp.float32)

    # 1) small-table fast path, add_inter_emb=True
    bu = jax.random.randint(k3, (8,), 0, num_users, dtype=jnp.int32)
    out = jax.block_until_ready(
        cfkg_query_encoder(bu, user_emb, rel_emb, add_inter_emb=True))
    ref = user_emb[bu] + rel_emb[-1]
    assert out.shape == (8, embed_dim)
    assert jnp.allclose(out, ref, atol=1e-5), "mismatch (fast path, add=True)"

    # 2) fast path, add_inter_emb=False
    out2 = jax.block_until_ready(
        cfkg_query_encoder(bu, user_emb, rel_emb, add_inter_emb=False))
    assert jnp.allclose(out2, user_emb[bu], atol=1e-5), "mismatch (fast path, add=False)"

    # 3) forced HBM row-gather path: ragged batch, multi-chunk grid,
    #    double-buffered DMA gather + aggregate wait.
    bu3 = jax.random.randint(k4, (19,), 0, num_users, dtype=jnp.int32)
    out3 = jax.block_until_ready(
        cfkg_query_encoder(bu3, user_emb, rel_emb, add_inter_emb=True,
                           block_b=8, small_table_users=0))
    ref3 = user_emb[bu3] + rel_emb[-1]
    assert out3.shape == (19, embed_dim)
    assert jnp.allclose(out3, ref3, atol=1e-5), "mismatch (gather path, ragged)"

    # 4) bf16 embeddings on the gather path: exercises dtype-aware sublane
    #    rounding (16-row tiles) and bf16 row DMAs / add.
    user_bf = user_emb.astype(jnp.bfloat16)
    rel_bf = rel_emb.astype(jnp.bfloat16)
    bu4 = jax.random.randint(k5, (10,), 0, num_users, dtype=jnp.int32)
    out4 = jax.block_until_ready(
        cfkg_query_encoder(bu4, user_bf, rel_bf, add_inter_emb=True,
                           small_table_users=0))
    ref4 = user_bf[bu4] + rel_bf[-1]
    assert out4.shape == (10, embed_dim)
    assert jnp.allclose(out4.astype(jnp.float32), ref4.astype(jnp.float32),
                        atol=2e-2), "mismatch (gather path, bf16)"

    print("KERNEL_OK")
</pallas_src>

<mosaic_0001>
module attributes {stable_mosaic.version = 11 : i64} {
  func.func @kernel(%arg0: i32, %arg1: memref<8x1xi32, #tpu.memory_space<vmem>>, %arg2: memref<16x128xf32, #tpu.memory_space<vmem>>, %arg3: memref<1x128xf32, #tpu.memory_space<vmem>>, %arg4: memref<8x128xf32, #tpu.memory_space<vmem>>) attributes {dimension_semantics = [#tpu.dimension_semantics<parallel>], iteration_bounds = array<i64: 1>, scalar_prefetch = 0 : i64, scratch_operands = 0 : i64, tpu.core_type = #tpu.core_type<tc>, window_params = [{transform_indices = @transform_0, window_bounds = array<i64: 8, 1>}, {pipeline_mode = #tpu.pipeline_mode<synchronous>, transform_indices = @transform_1, window_bounds = array<i64: 16, 128>}, {pipeline_mode = #tpu.pipeline_mode<synchronous>, transform_indices = @transform_2, window_bounds = array<i64: 1, 128>}, {transform_indices = @transform_3, window_bounds = array<i64: 8, 128>}]} {
    %c0 = arith.constant 0 : index
    %c0_0 = arith.constant 0 : index
    %0 = vector.load %arg1[%c0, %c0_0] : memref<8x1xi32, #tpu.memory_space<vmem>>, vector<8x1xi32>
    %1 = tpu.iota {dimensions = array<i32: 1>} : vector<8x16xi32>
    %2 = vector.broadcast %0 : vector<8x1xi32> to vector<8x16xi32>
    %3 = arith.cmpi eq, %1, %2 : vector<8x16xi32>
    %4 = arith.extui %3 : vector<8x16xi1> to vector<8x16xi32>
    %5 = arith.sitofp %4 : vector<8x16xi32> to vector<8x16xf32>
    %c0_1 = arith.constant 0 : index
    %c0_2 = arith.constant 0 : index
    %6 = vector.load %arg2[%c0_1, %c0_2] : memref<16x128xf32, #tpu.memory_space<vmem>>, vector<16x128xf32>
    %cst = arith.constant dense<0.000000e+00> : vector<8x128xf32>
    %7 = tpu.matmul %5, %6, %cst {dimension_numbers = #tpu.dot_dimension_numbers<[1], [0], [0], [1], [0, 0, 1, 1], [], []>} : vector<8x16xf32>, vector<16x128xf32>, vector<8x128xf32> -> vector<8x128xf32>
    %c0_3 = arith.constant 0 : index
    %c0_4 = arith.constant 0 : index
    %8 = vector.load %arg3[%c0_3, %c0_4] : memref<1x128xf32, #tpu.memory_space<vmem>>, vector<1x128xf32>
    %9 = vector.broadcast %8 : vector<1x128xf32> to vector<8x128xf32>
    %10 = arith.addf %7, %9 : vector<8x128xf32>
    %c0_5 = arith.constant 0 : index
    %c0_6 = arith.constant 0 : index
    %11 = vector.load %arg4[%c0_5, %c0_6] : memref<8x128xf32, #tpu.memory_space<vmem>>, vector<8x128xf32>
    tpu.vector_store %arg4[%c0_5, %c0_6], %10 {strides = array<i32>} : memref<8x128xf32, #tpu.memory_space<vmem>>, vector<8x128xf32>,
    return
  }
  func.func @transform_0(%arg0: i32) -> (i32, i32) {
    %c0_i32 = arith.constant 0 : i32
    %c0_i32_0 = arith.constant 0 : i32
    return %arg0, %c0_i32 : i32, i32
  }
  func.func @transform_1(%arg0: i32) -> (i32, i32) {
    %c0_i32 = arith.constant 0 : i32
    %c0_i32_0 = arith.constant 0 : i32
    %c0_i32_1 = arith.constant 0 : i32
    return %c0_i32, %c0_i32_0 : i32, i32
  }
  func.func @transform_2(%arg0: i32) -> (i32, i32) {
    %c0_i32 = arith.constant 0 : i32
    %c0_i32_0 = arith.constant 0 : i32
    %c0_i32_1 = arith.constant 0 : i32
    return %c0_i32, %c0_i32_0 : i32, i32
  }
  func.func @transform_3(%arg0: i32) -> (i32, i32) {
    %c0_i32 = arith.constant 0 : i32
    %c0_i32_0 = arith.constant 0 : i32
    return %arg0, %c0_i32 : i32, i32
  }
}

</mosaic_0001>

<llo_original>
// kernel: cfkg_query_encoder.1
$region0: #{cfkg_query_encoder.1}
  #allocation0 [shape = 'u32[]', space=smem, size = 0x4, offset = 0x4, fixed_abs, tag = 'smem constant byte address 0x4 - core index']
  #allocation1 [shape = 'u32[144,128]{1,0:T(1,128)}', space=vmem, size = 0x12000, scoped, tag = 'internal scratch']
  %s0 = inlined_call_operand.vmem [shape: s32[8,1], index: 0, kind: input, shape index: {}]
  %s1 = inlined_call_operand.hbm [shape: f32[16,128], index: 1, kind: input, shape index: {}]
  %s2 = inlined_call_operand.vmem [shape: f32[1,128], index: 2, kind: input, shape index: {}]
  %s3 = inlined_call_operand.hbm [shape: f32[8,128], index: 3, kind: output, shape index: {}]
  %s4 = sld [smem:[#allocation0]]
  $region26: #{cfkg_query_encoder.1} parent=0
    _
  %s6 = ssub.s32 1, %s4
  %s7 = scalar_select 0, %s6, %s4
  $region1: #{cfkg_query_encoder.1} parent=0
    #allocation2 [shape = 'u8[8192]{0}', space=vmem, size = 0x2000, scoped, tag = 'input window, operand 1, single buffered']
    #allocation3 [shape = 's32[1]{0}', space=sflag, size = 0x4, scoped, tag = 'scoped memory for cfkg_query_encoder.1']
    #allocation4 [shape = 's32[1]{0}', space=sflag, size = 0x4, scoped, tag = 'scoped memory for cfkg_query_encoder.1']
    #allocation5 [shape = 'u8[4096]{0}', space=vmem, size = 0x1000, scoped, tag = 'output window, operand 0, single buffered']
    %8 = vsyncpa [#allocation3], 0
    %9 = vsyncpa [#allocation4], 0
    // Predicated region
    $region2: #{cfkg_query_encoder.1} parent=1 // pred_check
      _
    $region3: #{cfkg_query_encoder.1} parent=1 // pred_check_branch
      %11 = sbr.rel (0) target = $region5
    $region4: #{cfkg_query_encoder.1} parent=1 // pred_region
      _
    $region5: #{cfkg_query_encoder.1} parent=1 // pred_fallthru
      _
    // Predicated region
    $region6: #{cfkg_query_encoder.1} parent=1 // pred_check
      _
    $region7: #{cfkg_query_encoder.1} parent=1 // pred_check_branch
      %13 = sbr.rel (0) target = $region9
    $region8: #{cfkg_query_encoder.1} parent=1 // pred_region
      %s15 = ssub.s32 256, 256
      %16 = vsyncadd [#allocation3], %s15
      %s17 = sshll.u32 [#allocation2], 4
      %s18 = int_to_ptr.vmem [resolvable:$true] %s17
      %23 = dma.hbm_to_vmem [thread:$0]  %s1, 256, %s18, [#allocation3], 128, 128, 8
    $region9: #{cfkg_query_encoder.1} parent=1 // pred_fallthru
      _
    // Predicated region
    $region10: #{cfkg_query_encoder.1} parent=1 // pred_check
      _
    $region11: #{cfkg_query_encoder.1} parent=1 // pred_check_branch
      %25 = sbr.rel (0) target = $region13
    $region12: #{cfkg_query_encoder.1} parent=1 // pred_region
      _
    $region13: #{cfkg_query_encoder.1} parent=1 // pred_fallthru
      _
    // Predicated region
    $region14: #{cfkg_query_encoder.1} parent=1 // pred_check
      _
    $region15: #{cfkg_query_encoder.1} parent=1 // pred_check_branch
      %27 = sbr.rel (0) target = $region17
    $region16: #{cfkg_query_encoder.1} parent=1 // pred_region
      %28 = dma.done [#allocation3], 256
    $region17: #{cfkg_query_encoder.1} parent=1 // pred_fallthru
      _
    %v29 = vld [vmem:[%s0] sm:$0xff]
    %v30 = vlaneseq
    %v31 = vand.u32 %v30, 127
    %32 = vset.pattern.permute.xlu0 0
    %33 = vperm.xlu0 %32, %v29
    %v34 = vpop.permute.xlu0 %33
    %vm35 = vcmp.eq.s32.totalorder %v31, %v34
    %v36 = vsel %vm35, 1, 0
    %v37 = vcvt.s32.f32 %v36
    %v38 = vld [vmem:[#allocation2] sm:$0xff]
    %v39 = vld [vmem:[#allocation2 + $0x8] sm:$0xff]
    %v40 = vld [vmem:[%s2] sm:$0x1]
    %v42 = vlaneseq
    %v43 = vshrl.u32 %v42, 7
    %v44 = vsub.s32 0, %v43
    %v45 = vrot.slane %v40, %v44
    %vm47 = vcmask 130048
    %v49 = vsel %vm47, %v37, 0
    %51 = vmatprep.subr.mxu0 0.0
    %52 = vmatpush1.msra.mxu0 0.0
    %53 = vmatprep.subr.mxu0 0.0
    %54 = vmatpush1.msra.mxu0 0.0
    %55 = vmatprep.subr.mxu0 0.0
    %56 = vmatpush1.msra.mxu0 0.0
    %57 = vmatprep.subr.mxu0 0.0
    %58 = vmatpush1.msra.mxu0 0.0
    %59 = vmatprep.subr.mxu0 0.0
    %60 = vmatpush1.msra.mxu0 0.0
    %61 = vmatprep.subr.mxu0 0.0
    %62 = vmatpush1.msra.mxu0 0.0
    %63 = vmatprep.subr.mxu0 0.0
    %64 = vmatpush1.msra.mxu0 0.0
    %65 = vmatprep.subr.mxu0 0.0
    %66 = vmatpush1.msra.mxu0 0.0
    %67 = vmatprep.subr.mxu0 0.0
    %68 = vmatpush1.msra.mxu0 0.0
    %69 = vmatprep.subr.mxu0 0.0
    %70 = vmatpush1.msra.mxu0 0.0
    %71 = vmatprep.subr.mxu0 0.0
    %72 = vmatpush1.msra.mxu0 0.0
    %73 = vmatprep.subr.mxu0 0.0
    %74 = vmatpush1.msra.mxu0 0.0
    %75 = vmatprep.subr.mxu0 0.0
    %76 = vmatpush1.msra.mxu0 0.0
    %77 = vmatprep.subr.mxu0 0.0
    %78 = vmatpush1.msra.mxu0 0.0
    %79 = vmatprep.subr.mxu0 0.0
    %80 = vmatpush1.msra.mxu0 %v39
    %81 = vmatprep.subr.mxu0 0.0
    %82 = vmatpush1.msra.mxu0 %v38
    %83 = vmatprep.subr.mxu0 0.0
    %84 = vmatpush2.msra.mxu0 0.0
    %85 = vmatprep.subr.mxu0 0.0
    %86 = vmatpush2.msra.mxu0 0.0
    %87 = vmatprep.subr.mxu0 0.0
    %88 = vmatpush2.msra.mxu0 0.0
    %89 = vmatprep.subr.mxu0 0.0
    %90 = vmatpush2.msra.mxu0 0.0
    %91 = vmatprep.subr.mxu0 0.0
    %92 = vmatpush2.msra.mxu0 0.0
    %93 = vmatprep.subr.mxu0 0.0
    %94 = vmatpush2.msra.mxu0 0.0
    %95 = vmatprep.subr.mxu0 0.0
    %96 = vmatpush2.msra.mxu0 0.0
    %97 = vmatprep.subr.mxu0 0.0
    %98 = vmatpush2.msra.mxu0 0.0
    %99 = vmatprep.subr.mxu0 0.0
    %100 = vmatpush2.msra.mxu0 0.0
    %101 = vmatprep.subr.mxu0 0.0
    %102 = vmatpush2.msra.mxu0 0.0
    %103 = vmatprep.subr.mxu0 0.0
    %104 = vmatpush2.msra.mxu0 0.0
    %105 = vmatprep.subr.mxu0 0.0
    %106 = vmatpush2.msra.mxu0 0.0
    %107 = vmatprep.subr.mxu0 0.0
    %108 = vmatpush2.msra.mxu0 0.0
    %109 = vmatprep.subr.mxu0 0.0
    %110 = vmatpush2.msra.mxu0 0.0
    %111 = vmatprep.subr.mxu0 0.0
    %112 = vmatpush2.msra.mxu0 0.0
    %113 = vmatprep.subr.mxu0 0.0
    %114 = vmatpush2.msra.mxu0 0.0
    %115 = vmatprep.mubr.f32.mxu0 0.0
    %116 = vmatmul.mubr.f32.gmra.mxu0 %v49
    %v117 = vpop.f32.mrf.mxu0
    %v118 = vadd.f32 %v45, %v117
    %v119 = vpop.f32.mrf.mxu0
    %120 = vdwg.mxu0
    %121 = vst [vmem:[#allocation5] sm:$0xff] %v118
    // Predicated region
    $region18: #{cfkg_query_encoder.1} parent=1 // pred_check
      _
    $region19: #{cfkg_query_encoder.1} parent=1 // pred_check_branch
      %123 = sbr.rel (0) target = $region21
    $region20: #{cfkg_query_encoder.1} parent=1 // pred_region
      %s125 = ssub.s32 128, 128
      %126 = vsyncadd [#allocation4], %s125
      %s128 = sshll.u32 [#allocation5], 4
      %s129 = int_to_ptr.vmem [resolvable:$true] %s128
      %131 = dma.vmem_to_hbm [thread:$0]  %s129, 128, %s3, [#allocation4]
    $region21: #{cfkg_query_encoder.1} parent=1 // pred_fallthru
      _
    // Predicated region
    $region22: #{cfkg_query_encoder.1} parent=1 // pred_check
      _
    $region23: #{cfkg_query_encoder.1} parent=1 // pred_check_branch
      %133 = sbr.rel (0) target = $region25
    $region24: #{cfkg_query_encoder.1} parent=1 // pred_region
      %134 = dma.done [#allocation4], 128
    $region25: #{cfkg_query_encoder.1} parent=1 // pred_fallthru
      _
    %135 = vsyncpa [#allocation3], 1
    %136 = vsyncpa [#allocation4], 1

</llo_original>
